<compile_context>
chip_gen: v5e
topology: v5e:2x2
jax: 0.10.0
libtpu: 0.0.40
codegen_flags: <defaults>
</compile_context>

<pallas_src>
import jax
import jax.numpy as jnp
from jax.experimental import pallas as pl
from jax.experimental.pallas import tpu as pltpu


# -----------------------------------------------------------------------------
# Kernel: transpose one (tr, tc) tile -> (tc, tr) via the XLU.
# -----------------------------------------------------------------------------
def _transpose_kernel(x_ref, o_ref):
    # x_ref block: (1, tr, tc)   o_ref block: (1, tc, tr)
    o_ref[0] = x_ref[0].T


def _pick_tile(d):
    """Largest of 512/256/128 dividing d, else the full extent (always legal)."""
    for t in (512, 256, 128):
        if d % t == 0:
            return t
    return d


def transpose_pallas(x, dim_1, dim_2):
    """Pallas equivalent of torch.Tensor.transpose(dim_1, dim_2)."""
    nd = x.ndim
    a = dim_1 % nd
    b = dim_2 % nd
    if a == b:
        return x
    a, b = (a, b) if a < b else (b, a)
    if (a, b) != (nd - 2, nd - 1):
        # TODO(synk): only last-two-axis swaps (the VarianceAdaptor use of
        # Transpose(-1, -2)) have a Pallas kernel path; arbitrary axis pairs
        # are not implemented here.
        raise NotImplementedError("transpose_pallas only supports swapping the last two axes")

    lead = x.shape[:-2]
    B = 1
    for s in lead:
        B *= s
    R, C = x.shape[-2], x.shape[-1]
    x3 = x.reshape(B, R, C)

    tr = _pick_tile(R)   # tile along input rows  == output lanes
    tc = _pick_tile(C)   # tile along input lanes == output rows

    out = pl.pallas_call(
        _transpose_kernel,
        out_shape=jax.ShapeDtypeStruct((B, C, R), x.dtype),
        grid_spec=pltpu.PrefetchScalarGridSpec(
            num_scalar_prefetch=0,
            grid=(B, C // tc, R // tr),
            in_specs=[
                pl.BlockSpec((1, tr, tc), lambda bi, cj, ri: (bi, ri, cj)),
            ],
            out_specs=pl.BlockSpec((1, tc, tr), lambda bi, cj, ri: (bi, cj, ri)),
        ),
        compiler_params=pltpu.CompilerParams(
            dimension_semantics=("parallel", "parallel", "parallel")),
    )(x3)

    return out.reshape(*lead, C, R)


class Transpose:
    """Mirror of the PyTorch module (forward only)."""

    def __init__(self, dim_1, dim_2):
        self.dim_1 = dim_1
        self.dim_2 = dim_2

    def __call__(self, x):
        return transpose_pallas(x, self.dim_1, self.dim_2)


if __name__ == "__main__":
    key = jax.random.PRNGKey(0)
    k1, k2 = jax.random.split(key)

    # Case 1: small shapes matching VarianceAdaptor usage — (batch, time, channels)
    # with Transpose(-1, -2) producing (batch, channels, time).
    x_small = jax.random.normal(k1, (2, 16, 32), dtype=jnp.float32)
    mod = Transpose(-1, -2)
    y_small = mod(x_small)
    jax.block_until_ready(y_small)
    assert y_small.shape == (2, 32, 16)
    assert jnp.array_equal(y_small, jnp.swapaxes(x_small, -1, -2))

    # Case 2: lane-aligned shape exercising the multi-tile grid path
    # (tr=128, tc=256 -> grid (2, 1, 3)).
    x_big = jax.random.normal(k2, (2, 384, 256), dtype=jnp.float32)
    y_big = transpose_pallas(x_big, 1, 2)
    jax.block_until_ready(y_big)
    assert y_big.shape == (2, 256, 384)
    assert jnp.array_equal(y_big, jnp.swapaxes(x_big, 1, 2))

    print("KERNEL_OK")
</pallas_src>

<mosaic_0001>
module attributes {stable_mosaic.version = 11 : i64} {
  func.func @_transpose_kernel(%arg0: i32, %arg1: i32, %arg2: i32, %arg3: memref<1x16x32xf32, #tpu.memory_space<vmem>>, %arg4: memref<1x32x16xf32, #tpu.memory_space<vmem>>) attributes {dimension_semantics = [#tpu.dimension_semantics<parallel>, #tpu.dimension_semantics<parallel>, #tpu.dimension_semantics<parallel>], iteration_bounds = array<i64: 2, 1, 1>, scalar_prefetch = 0 : i64, scratch_operands = 0 : i64, tpu.core_type = #tpu.core_type<tc>, window_params = [{transform_indices = @transform_0, window_bounds = array<i64: 1, 16, 32>}, {transform_indices = @transform_1, window_bounds = array<i64: 1, 32, 16>}]} {
    %c0 = arith.constant 0 : index
    %c0_0 = arith.constant 0 : index
    %c0_1 = arith.constant 0 : index
    %0 = vector.load %arg3[%c0, %c0_0, %c0_1] : memref<1x16x32xf32, #tpu.memory_space<vmem>>, vector<1x16x32xf32>
    %1 = vector.shape_cast %0 : vector<1x16x32xf32> to vector<16x32xf32>
    %2 = tpu.transpose %1, [1, 0] : vector<16x32xf32> -> vector<32x16xf32>
    %c0_2 = arith.constant 0 : index
    %c0_3 = arith.constant 0 : index
    %c0_4 = arith.constant 0 : index
    %3 = vector.load %arg4[%c0_2, %c0_3, %c0_4] : memref<1x32x16xf32, #tpu.memory_space<vmem>>, vector<1x32x16xf32>
    %4 = vector.shape_cast %3 : vector<1x32x16xf32> to vector<32x16xf32>
    %5 = vector.shape_cast %2 : vector<32x16xf32> to vector<1x32x16xf32>
    tpu.vector_store %arg4[%c0_2, %c0_3, %c0_4], %5 {strides = array<i32>} : memref<1x32x16xf32, #tpu.memory_space<vmem>>, vector<1x32x16xf32>,
    return
  }
  func.func @transform_0(%arg0: i32, %arg1: i32, %arg2: i32) -> (i32, i32, i32) {
    %c0_i32 = arith.constant 0 : i32
    return %arg0, %arg2, %arg1 : i32, i32, i32
  }
  func.func @transform_1(%arg0: i32, %arg1: i32, %arg2: i32) -> (i32, i32, i32) {
    %c0_i32 = arith.constant 0 : i32
    return %arg0, %arg1, %arg2 : i32, i32, i32
  }
}

</mosaic_0001>

<llo_original>
// kernel: tpu_custom_call.1
$region0: #{tpu_custom_call.1}
  #allocation0 [shape = 'u32[]', space=smem, size = 0x4, offset = 0x4, fixed_abs, tag = 'smem constant byte address 0x4 - core index']
  #allocation1 [shape = 'u32[72,128]{1,0:T(1,128)}', space=vmem, size = 0x9000, scoped, tag = 'internal scratch']
  %s0 = inlined_call_operand.hbm [shape: f32[2,16,32], index: 0, kind: input, shape index: {}]
  %s1 = inlined_call_operand.vmem [shape: f32[2,32,16], index: 1, kind: output, shape index: {}]
  %s2 = sld [smem:[#allocation0]]
  $region41: #{tpu_custom_call.1} parent=0
    _
  %s4 = ssub.s32 1, %s2
  %s5 = scalar_select 0, %s4, %s2
  $region1: #{tpu_custom_call.1} parent=0
    #allocation2 [shape = 'u8[16384]{0}', space=vmem, size = 0x4000, scoped, tag = 'input window, operand 0']
    #allocation3 [shape = 's32[2]{0}', space=sflag, size = 0x8, scoped, tag = 'scoped memory for tpu_custom_call.1']
    %6 = vsyncpa [#allocation3], 0
    %s7 = scalar_lea.sflag [#allocation3], 1
    %8 = vsyncpa %s7, 0
    loop: start=0, step=1, limit=4
    $region2: #{tpu_custom_call.1} parent=1 // loop_pre_header
      _
    $region3: #{tpu_custom_call.1} parent=1 // loop_header
      %s10 = sphi 0, %s14
      %p11 = scmp.ge.s32.totalorder %s10, 4
      %s17 = sphi 0, %s36
      %s18 = sphi 0, %s32
      %s19 = sphi 0, %s28
      %s20 = sphi 0, %s17
      %s21 = sphi 0, %s18
      %s22 = sphi 0, %s19
      %s23 = sphi 0, %s20
      %s24 = sphi 0, %s21
      %s25 = sphi 0, %s22
      %s43 = sphi 0, %s45
      %s46 = sphi 0, %s43
      %s47 = sphi 0, %s46
      %s63 = sphi 0, %s47
      %s73 = sphi 0, %s75
      %s76 = sphi 0, %s73
      %s77 = sphi 0, %s76
      %s93 = sphi 0, %s77
    $region4: #{tpu_custom_call.1} parent=1 // loop_header_branch
      %13 = sbr.rel (%p11) target = $region8
    $region5: #{tpu_custom_call.1} parent=1 // loop_body
      %s15 = ssub.s32 %s10, 1
      %s16 = ssub.s32 %s10, 2
      %s26 = sadd.s32 1, %s19
      %p27 = scmp.ge.s32.totalorder %s26, 1
      %s28 = scalar_select %p27, 0, %s26
      %s29 = sadd.s32 1, %s18
      %s30 = scalar_select %p27, %s29, %s18
      %p31 = scmp.ge.s32.totalorder %s30, 1
      %s32 = scalar_select %p31, 0, %s30
      %s33 = sadd.s32 1, %s17
      %s34 = scalar_select %p31, %s33, %s17
      %p35 = scmp.ge.s32.totalorder %s34, 2
      %s36 = scalar_select %p35, 0, %s34
      %s37 = ssub.s32 %s17, %s36
      %s38 = ssub.s32 %s19, %s28
      %s39 = sor.u32 %s37, %s38
      %s40 = ssub.s32 %s18, %s32
      %s41 = sor.u32 %s39, %s40
      %p42 = scmp.eq.s32.totalorder %s41, 0
      %s44 = sadd.s32 %s43, 1
      %s45 = scalar_select %p42, %s43, %s44
      %p48 = pneg %p42
      %p49 = scmp.eq.s32.totalorder %s10, 1
      %p50 = por %p48, %p49
      %p51 = scmp.ne.s32.totalorder %s43, %s46
      %p52 = scmp.eq.s32.totalorder %s10, 0
      %p53 = por %p51, %p52
      %p54 = scmp.ne.s32.totalorder %s43, %s46
      %p55 = scmp.eq.s32.totalorder %s15, 1
      %p56 = por %p54, %p55
      %p57 = scmp.ne.s32.totalorder %s46, %s47
      %p58 = scmp.eq.s32.totalorder %s15, 0
      %p59 = por %p57, %p58
      %p60 = scmp.ne.s32.totalorder %s46, %s47
      %p61 = scmp.eq.s32.totalorder %s16, 1
      %p62 = por %p60, %p61
      %p64 = scmp.ne.s32.totalorder %s47, %s63
      %p65 = scmp.eq.s32.totalorder %s16, 0
      %p66 = por %p64, %p65
      %s67 = ssub.s32 %s17, %s36
      %s68 = ssub.s32 %s18, %s32
      %s69 = sor.u32 %s67, %s68
      %s70 = ssub.s32 %s19, %s28
      %s71 = sor.u32 %s69, %s70
      %p72 = scmp.eq.s32.totalorder %s71, 0
      %s74 = sadd.s32 %s73, 1
      %s75 = scalar_select %p72, %s73, %s74
      %p78 = pneg %p72
      %p79 = scmp.eq.s32.totalorder %s10, 1
      %p80 = por %p78, %p79
      %p81 = scmp.ne.s32.totalorder %s73, %s76
      %p82 = scmp.eq.s32.totalorder %s10, 0
      %p83 = por %p81, %p82
      %p84 = scmp.ne.s32.totalorder %s73, %s76
      %p85 = scmp.eq.s32.totalorder %s15, 1
      %p86 = por %p84, %p85
      %p87 = scmp.ne.s32.totalorder %s76, %s77
      %p88 = scmp.eq.s32.totalorder %s15, 0
      %p89 = por %p87, %p88
      %p90 = scmp.ne.s32.totalorder %s76, %s77
      %p91 = scmp.eq.s32.totalorder %s16, 1
      %p92 = por %p90, %p91
      %p94 = scmp.ne.s32.totalorder %s77, %s93
      %p95 = scmp.eq.s32.totalorder %s16, 0
      %p96 = por %p94, %p95
      %p97 = scmp.le.s32.totalorder 1, %s10
      %p98 = scmp.lt.s32.totalorder %s10, 3
      %p99 = pnand %p97, %p98
      %p100 = pneg %p99
      // Predicated region
      $region9: #{tpu_custom_call.1} parent=5 // pred_check
        _
      $region10: #{tpu_custom_call.1} parent=5 // pred_check_branch
        %102 = sbr.rel (%p99) target = $region12
      $region11: #{tpu_custom_call.1} parent=5 // pred_region
        %s103 = ssub.s32 %s10, 1
      $region12: #{tpu_custom_call.1} parent=5 // pred_fallthru
        _
      %p104 = scmp.lt.s32.totalorder %s10, 2
      // Predicated region
      $region13: #{tpu_custom_call.1} parent=5 // pred_check
        %p105 = pneg %p104
      $region14: #{tpu_custom_call.1} parent=5 // pred_check_branch
        %107 = sbr.rel (%p105) target = $region16
      $region15: #{tpu_custom_call.1} parent=5 // pred_region
        // Predicated region
        $region17: #{tpu_custom_call.1} parent=15 // pred_check
          %p108 = pneg %p53
        $region18: #{tpu_custom_call.1} parent=15 // pred_check_branch
          %110 = sbr.rel (%p108) target = $region20
        $region19: #{tpu_custom_call.1} parent=15 // pred_region
          %s111 = sand.u32 %s43, 1
          %s112 = scalar_lea.sflag [#allocation3], %s111
          %s113 = sand.u32 %s43, 1
          %s114 = smul.addr %s113, 16
          %s115 = scalar_lea.vmem [#allocation2], %s114
          %s116 = smul.u32 2, %s19
          %118 = vsyncadd %s112, 0
          %s119 = sadd.s32 %s18, %s116
          %s120 = smul.addr %s17, 2
          %s121 = sadd.s32 %s119, %s120
          %s122 = smul.addr %s121, 8
          %s123 = scalar_lea.hbm %s0, %s122
          %s124 = sshll.u32 %s123, 4
          %s125 = int_to_ptr.hbm [resolvable:$true] %s124
          %s126 = sshll.u32 %s115, 4
          %s127 = int_to_ptr.vmem [resolvable:$true] %s126
          %132 = dma.hbm_to_vmem [thread:$0]  %s125, 256, %s127, %s112, 128, 128, 8
        $region20: #{tpu_custom_call.1} parent=15 // pred_fallthru
          _
      $region16: #{tpu_custom_call.1} parent=5 // pred_fallthru
        _
      %p133 = scmp.le.s32.totalorder 1, %s10
      %p134 = scmp.lt.s32.totalorder %s10, 3
      %p135 = pnand %p133, %p134
      %p136 = pneg %p135
      // Predicated region
      $region21: #{tpu_custom_call.1} parent=5 // pred_check
        _
      $region22: #{tpu_custom_call.1} parent=5 // pred_check_branch
        %138 = sbr.rel (%p135) target = $region24
      $region23: #{tpu_custom_call.1} parent=5 // pred_region
        %s139 = ssub.s32 %s10, 1
        %s140 = sand.u32 %s46, 1
        %s141 = scalar_lea.sflag [#allocation3], %s140
        %s142 = sand.u32 %s46, 1
        %s143 = smul.addr %s142, 16
        %s144 = scalar_lea.vmem [#allocation2], %s143
        // Predicated region
        $region25: #{tpu_custom_call.1} parent=23 // pred_check
          %p145 = pneg %p59
        $region26: #{tpu_custom_call.1} parent=23 // pred_check_branch
          %147 = sbr.rel (%p145) target = $region28
        $region27: #{tpu_custom_call.1} parent=23 // pred_region
          %149 = dma.done %s141, 256
        $region28: #{tpu_custom_call.1} parent=23 // pred_fallthru
          _
        %s150 = sand.u32 %s46, 1
        %s151 = scalar_lea.sflag [#allocation3], %s150
        %s152 = sand.u32 %s46, 1
        %s153 = smul.addr %s152, 16
        %s154 = scalar_lea.vmem [#allocation2], %s153
        %p155 = pneg %p59
        %p156 = pneg %p56
        %p157 = pneg %p89
        %p158 = pneg %p86
        %s159 = smul.u32 4, %s21
        %p160 = scmp.lt.s32.totalorder %s20, 1
        %s161 = scalar_select %p160, %s20, 1
        %p162 = scmp.lt.s32.totalorder %s159, 3
        %s163 = scalar_select %p162, %s159, 3
        %p164 = scmp.lt.s32.totalorder %s22, 0
        %s165 = scalar_select %p164, %s22, 0
        %s166 = sadd.s32 %s165, %s163
        %s167 = smul.addr %s161, 4
        %s168 = sadd.s32 %s166, %s167
        %s169 = smul.addr %s168, 8
        %s170 = scalar_lea.vmem %s1, %s169
        %s171 = smul.u32 2, %s22
        %s172 = smul.u32 4, %s21
        %p173 = scmp.lt.s32.totalorder %s20, 1
        %s174 = scalar_select %p173, %s20, 1
        %p175 = scmp.lt.s32.totalorder %s172, 3
        %s176 = scalar_select %p175, %s172, 3
        %p177 = scmp.lt.s32.totalorder %s22, 0
        %s178 = scalar_select %p177, %s22, 0
        %s179 = sadd.s32 %s178, %s176
        %s180 = smul.addr %s174, 4
        %s181 = sadd.s32 %s179, %s180
        %s182 = smul.addr %s181, 8
        %s183 = scalar_lea.vmem %s1, %s182
        %s184 = smul.u32 4, %s21
        %v185 = vld [vmem:[%s144] sm:$0xff]
        %v186 = vld [vmem:[%s144 + $0x8] sm:$0xff]
        %187 = vxpose.xlu0.b32.start [1/16] %v185, 128
        %188 = vxpose.xlu0.b32.cont [2/16] %v186, 128
        %189 = vxpose.xlu0.b32.cont [3/16] 0.0, 128
        %190 = vxpose.xlu0.b32.cont [4/16] 0.0, 128
        %191 = vxpose.xlu0.b32.cont [5/16] 0.0, 128
        %192 = vxpose.xlu0.b32.cont [6/16] 0.0, 128
        %193 = vxpose.xlu0.b32.cont [7/16] 0.0, 128
        %194 = vxpose.xlu0.b32.cont [8/16] 0.0, 128
        %195 = vxpose.xlu0.b32.cont [9/16] 0.0, 128
        %196 = vxpose.xlu0.b32.cont [10/16] 0.0, 128
        %197 = vxpose.xlu0.b32.cont [11/16] 0.0, 128
        %198 = vxpose.xlu0.b32.cont [12/16] 0.0, 128
        %199 = vxpose.xlu0.b32.cont [13/16] 0.0, 128
        %200 = vxpose.xlu0.b32.cont [14/16] 0.0, 128
        %201 = vxpose.xlu0.b32.cont [15/16] 0.0, 128
        %202 = vxpose.xlu0.b32.end [16/16] 0.0, 128
        %v203 = vpop.trf.xlu0
        %v204 = vpop.trf.xlu0
        %v205 = vpop.trf.xlu0
        %v206 = vpop.trf.xlu0
        %v207 = vpop.trf.xlu0
        %v208 = vpop.trf.xlu0
        %v209 = vpop.trf.xlu0
        %v210 = vpop.trf.xlu0
        %v211 = vpop.trf.xlu0
        %v212 = vpop.trf.xlu0
        %v213 = vpop.trf.xlu0
        %v214 = vpop.trf.xlu0
        %v215 = vpop.trf.xlu0
        %v216 = vpop.trf.xlu0
        %v217 = vpop.trf.xlu0
        %v218 = vpop.trf.xlu0
        %vm219 = vcmask 130048
        %220 = vst.msk [vmem:[%s183] sm:$0xff] %vm219, %v203
        %221 = vst.msk [vmem:[%s183 + $0x8] sm:$0xff] %vm219, %v204
        %222 = vst.msk [vmem:[%s183 + $0x10] sm:$0xff] %vm219, %v205
        %223 = vst.msk [vmem:[%s183 + $0x18] sm:$0xff] %vm219, %v206
        %s224 = smul.u32 4, %s21
        %p225 = scmp.lt.s32.totalorder %s20, 1
        %s226 = scalar_select %p225, %s20, 1
        %p227 = scmp.lt.s32.totalorder %s224, 3
        %s228 = scalar_select %p227, %s224, 3
        %p229 = scmp.lt.s32.totalorder %s22, 0
        %s230 = scalar_select %p229, %s22, 0
        %s231 = sadd.s32 %s230, %s228
        %s232 = smul.addr %s226, 4
        %s233 = sadd.s32 %s231, %s232
        %s234 = smul.addr %s233, 8
        %s235 = scalar_lea.vmem %s1, %s234
        // Predicated region
        $region29: #{tpu_custom_call.1} parent=23 // pred_check
          %p236 = pneg %p86
        $region30: #{tpu_custom_call.1} parent=23 // pred_check_branch
          %238 = sbr.rel (%p236) target = $region32
        $region31: #{tpu_custom_call.1} parent=23 // pred_region
          %s239 = smul.u32 4, %s21
        $region32: #{tpu_custom_call.1} parent=23 // pred_fallthru
          _
      $region24: #{tpu_custom_call.1} parent=5 // pred_fallthru
        _
      %p240 = scmp.le.s32.totalorder 2, %s10
      // Predicated region
      $region33: #{tpu_custom_call.1} parent=5 // pred_check
        %p241 = pneg %p240
      $region34: #{tpu_custom_call.1} parent=5 // pred_check_branch
        %243 = sbr.rel (%p241) target = $region36
      $region35: #{tpu_custom_call.1} parent=5 // pred_region
        %s244 = ssub.s32 %s10, 2
        // Predicated region
        $region37: #{tpu_custom_call.1} parent=35 // pred_check
          %p245 = pneg %p92
        $region38: #{tpu_custom_call.1} parent=35 // pred_check_branch
          %247 = sbr.rel (%p245) target = $region40
        $region39: #{tpu_custom_call.1} parent=35 // pred_region
          %s248 = smul.u32 4, %s24
          %p249 = scmp.lt.s32.totalorder %s23, 1
          %s250 = scalar_select %p249, %s23, 1
          %p251 = scmp.lt.s32.totalorder %s248, 3
          %s252 = scalar_select %p251, %s248, 3
          %p253 = scmp.lt.s32.totalorder %s25, 0
          %s254 = scalar_select %p253, %s25, 0
          %s255 = sadd.s32 %s254, %s252
          %s256 = smul.addr %s250, 4
          %s257 = sadd.s32 %s255, %s256
          %s258 = smul.addr %s257, 8
          %s259 = scalar_lea.vmem %s1, %s258
        $region40: #{tpu_custom_call.1} parent=35 // pred_fallthru
          _
      $region36: #{tpu_custom_call.1} parent=5 // pred_fallthru
        _
    $region6: #{tpu_custom_call.1} parent=1 // loop_footer
      %s14 = sadd.s32 1, %s10
    $region7: #{tpu_custom_call.1} parent=1 // loop_footer_branch
      %9 = sbr.rel target = $region3
    $region8: #{tpu_custom_call.1} parent=1 // loop_exit
      _
    %260 = vsyncpa [#allocation3], 1
    %s261 = scalar_lea.sflag [#allocation3], 1
    %262 = vsyncpa %s261, 1

</llo_original>
